<compile_context>
chip_gen: v5e
topology: v5e:2x2
jax: 0.10.0
libtpu: 0.0.40
codegen_flags: <defaults>
</compile_context>

<pallas_src>
import functools

import jax
import jax.numpy as jnp
from jax import lax
from jax.experimental import pallas as pl
from jax.experimental.pallas import tpu as pltpu


# ----------------------------- tiling constants -----------------------------
LANE = 128                        # class axis padded to lane-dense multiples of 128
MAX_B_TILE = 32                   # batch tile (sublane aligned, bounds epilogue live ranges)
K_TILE = 512                      # reduction tile when W is too big to keep resident
W_RESIDENT_BUDGET = 8 * 1024 * 1024     # bf16 bytes of W allowed to stay VMEM-resident
VMEM_LIMIT = 48 * 1024 * 1024     # <= v7x's 64 MiB physical VMEM (also fine on v5e/v6e)
STATS_LANES = LANE                # packed per-sample scalars: lane0=loss, lane1=weight


def _round_up(n, m):
    return ((n + m - 1) // m) * m


def _pad2d(a, rows, cols):
    r, c = a.shape
    if r == rows and c == cols:
        return a                   # no-op for already-aligned shapes (demo path)
    return jnp.pad(a, ((0, rows - r), (0, cols - c)))


def _prepare(x, params):
    """Flatten NCHW row-major (torch .view(B,-1)), cast to bf16, lane-align shapes."""
    B = x.shape[0]
    x2d = x.reshape(B, -1).astype(jnp.bfloat16)          # single wrapper-side pass over x
    w = jnp.asarray(params["w"]).astype(jnp.bfloat16)
    b = jnp.asarray(params["b"], jnp.float32).reshape(1, -1)
    D, NC = w.shape

    NCp = _round_up(NC, LANE)
    Dp = _round_up(D, LANE)
    b_tile = min(_round_up(B, 8), MAX_B_TILE)
    Bp = _round_up(B, b_tile)

    # W residency decision: resident -> one K block, constant block index -> W fetched
    # once for the whole grid.  Otherwise stream K_TILE-deep slabs.
    if Dp * NCp * 2 <= W_RESIDENT_BUDGET:
        k_tile = Dp
    else:
        k_tile = min(Dp, K_TILE)
        Dp = _round_up(Dp, k_tile)

    x_p = _pad2d(x2d, Bp, Dp)          # only lane/sublane tails are padded (often no-op)
    w_p = _pad2d(w, Dp, NCp)           # padded rows/cols are zero -> padded logits are 0
    b_p = _pad2d(b, 1, NCp)
    meta = dict(B=B, NC=NC, Bp=Bp, Dp=Dp, NCp=NCp, b_tile=b_tile, k_tile=k_tile)
    return x_p, w_p, b_p, meta


# --------------------- fused kernel: net + WARP loss ---------------------
def _fused_warp_kernel(x_ref, w_ref, b_ref, y_ref,
                       stats_ref, prob_ref, acc_ref, *, margin, num_classes):
    k = pl.program_id(1)

    @pl.when(k == 0)
    def _init():
        acc_ref[...] = jnp.zeros_like(acc_ref)

    # MXU: bf16 x bf16 -> f32 accumulation of partial logits for this K tile.
    acc_ref[...] += jnp.dot(x_ref[...], w_ref[...],
                            preferred_element_type=jnp.float32)

    @pl.when(k == pl.num_programs(1) - 1)
    def _finalize():
        bt, ncp = acc_ref.shape
        s = acc_ref[...] + b_ref[...]                      # [bt, NCp] f32 logits
        acc_ref[...] = s                                   # reuse accumulator as logits scratch

        # validity mask over padded (fake) classes
        col = lax.broadcasted_iota(jnp.int32, (bt, ncp), 1)
        valid = (col < num_classes).astype(jnp.float32)
        y = y_ref[...].astype(jnp.float32) * valid
        pos_f = y                                          # [bt, NCp]
        neg_f = (1.0 - y) * valid                          # [bt, NCp]

        # pred_prob_list: numerically stable sigmoid; exp + reciprocal on the EUP;
        # bf16 writeback halves output bytes.
        z = jnp.exp(-jnp.abs(s))
        num = jnp.where(s >= 0.0, jnp.ones_like(z), z)
        prob_ref[...] = (num * pl.reciprocal(1.0 + z, approx=True)).astype(prob_ref.dtype)

        # closed-form pair count: (#pos) * (#neg) per row
        npos = jnp.sum(pos_f, axis=-1, keepdims=True)      # [bt, 1]
        nneg = jnp.sum(neg_f, axis=-1, keepdims=True)      # [bt, 1]
        n_pairs = npos * nneg

        n_tiles = ncp // LANE

        # Pairwise hinge: fori over 128-wide negative tiles (outer) and 128-wide positive
        # tiles (inner); per positive class a pure-VALU update into lane-resident [bt,128]
        # accumulators.  No rank-3 intermediates, no per-tile cross-lane reductions.
        def neg_body(nt, carry):
            noff = pl.multiple_of(nt * LANE, LANE)
            s_n = acc_ref[:, pl.ds(noff, LANE)]                         # [bt, 128]
            ncol = noff + lax.broadcasted_iota(jnp.int32, (bt, LANE), 1)
            nvalid = (ncol < num_classes).astype(jnp.float32)
            neg_n = (1.0 - y_ref[:, pl.ds(noff, LANE)].astype(jnp.float32)) * nvalid
            m_plus_sn = margin + s_n                                    # hoisted add

            def pos_body(pt, carry2):
                hl, vl = carry2
                poff = pl.multiple_of(pt * LANE, LANE)
                s_pt = acc_ref[:, pl.ds(poff, LANE)]                    # [bt, 128]
                pcol = poff + lax.broadcasted_iota(jnp.int32, (bt, LANE), 1)
                pvalid = (pcol < num_classes).astype(jnp.float32)
                pos_pt = y_ref[:, pl.ds(poff, LANE)].astype(jnp.float32) * pvalid
                for c in range(LANE):                    # static; temporaries die per-iter
                    s_pc = s_pt[:, c:c + 1]              # [bt, 1]
                    p_pc = pos_pt[:, c:c + 1]            # [bt, 1] in {0,1}
                    t = jnp.maximum(m_plus_sn - s_pc, 0.0) * neg_n      # [bt, 128]
                    hl = hl + t * p_pc
                    vl = vl + (t > 0.0).astype(jnp.float32) * p_pc
                return hl, vl

            return lax.fori_loop(0, n_tiles, pos_body, carry)

        init = (jnp.zeros((bt, LANE), jnp.float32),
                jnp.zeros((bt, LANE), jnp.float32))
        hinge_lane, viol_lane = lax.fori_loop(0, n_tiles, neg_body, init)

        # single cross-lane reduction per accumulator at the very end
        hinge_sum = jnp.sum(hinge_lane, axis=-1, keepdims=True)     # [bt, 1]
        violations = jnp.sum(viol_lane, axis=-1, keepdims=True)     # [bt, 1]

        # exact normalization (correctness feedback); rows w/o pos or neg labels -> 0
        loss = jnp.where(n_pairs > 0.0, hinge_sum / jnp.maximum(n_pairs, 1.0), 0.0)
        # TODO(synk): canonical WARP uses Phi(rank)=sum_j 1/j; log1p(#violations) is the
        #             deterministic stand-in chosen for the injected loss_fun.
        wt = jnp.log1p(violations)

        # lane-dense packed scalar output: lane 0 = loss, lane 1 = weight, rest 0
        lane = lax.broadcasted_iota(jnp.int32, (bt, STATS_LANES), 1)
        stats_ref[...] = (jnp.where(lane == 0, loss, 0.0)
                          + jnp.where(lane == 1, wt, 0.0))


# --------------------- logits-only kernel (calc_loss=False path) ---------------------
def _linear_kernel(x_ref, w_ref, b_ref, o_ref, acc_ref):
    k = pl.program_id(1)

    @pl.when(k == 0)
    def _init():
        acc_ref[...] = jnp.zeros_like(acc_ref)

    acc_ref[...] += jnp.dot(x_ref[...], w_ref[...],
                            preferred_element_type=jnp.float32)

    @pl.when(k == pl.num_programs(1) - 1)
    def _store():
        o_ref[...] = acc_ref[...] + b_ref[...]


def _linear_call(x_p, w_p, b_p, m):
    bt, kt, NCp, Bp, Dp = m["b_tile"], m["k_tile"], m["NCp"], m["Bp"], m["Dp"]
    grid = (Bp // bt, Dp // kt)
    return pl.pallas_call(
        _linear_kernel,
        out_shape=jax.ShapeDtypeStruct((Bp, NCp), jnp.float32),
        grid_spec=pltpu.PrefetchScalarGridSpec(
            num_scalar_prefetch=0,
            grid=grid,
            in_specs=[
                pl.BlockSpec((bt, kt), lambda i, k: (i, k)),
                pl.BlockSpec((kt, NCp), lambda i, k: (k, 0)),   # constant when K grid == 1
                pl.BlockSpec((1, NCp), lambda i, k: (0, 0)),
            ],
            out_specs=pl.BlockSpec((bt, NCp), lambda i, k: (i, 0)),
            scratch_shapes=[pltpu.VMEM((bt, NCp), jnp.float32)],
        ),
        compiler_params=pltpu.CompilerParams(
            dimension_semantics=("parallel", "arbitrary"),
            vmem_limit_bytes=VMEM_LIMIT,
        ),
    )(x_p, w_p, b_p)


# ------------------------------- module forward -------------------------------
def warp_loss_forward(x, y, params, margin, calc_loss=True):
    """Mirrors warpLoss.forward: logit = net(x).float(); optional loss_fun."""
    x_p, w_p, b_p, m = _prepare(x, params)
    B, NC = m["B"], m["NC"]

    if not calc_loss:
        logits = _linear_call(x_p, w_p, b_p, m)
        return lax.stop_gradient(logits[:B, :NC])          # mirrors .detach()

    bt, kt, NCp, Bp, Dp = m["b_tile"], m["k_tile"], m["NCp"], m["Bp"], m["Dp"]
    y_p = _pad2d(jnp.asarray(y).astype(jnp.bfloat16), Bp, NCp)   # 0/1 exact in bf16
    grid = (Bp // bt, Dp // kt)

    kernel = functools.partial(_fused_warp_kernel,
                               margin=float(margin), num_classes=NC)

    stats, probs = pl.pallas_call(
        kernel,
        out_shape=(
            jax.ShapeDtypeStruct((Bp, STATS_LANES), jnp.float32),   # packed loss/weight
            jax.ShapeDtypeStruct((Bp, NCp), jnp.bfloat16),          # pred_prob_list (padded)
        ),
        grid_spec=pltpu.PrefetchScalarGridSpec(
            num_scalar_prefetch=0,
            grid=grid,
            in_specs=[
                pl.BlockSpec((bt, kt), lambda i, k: (i, k)),        # x tiles (bf16)
                pl.BlockSpec((kt, NCp), lambda i, k: (k, 0)),       # W (bf16; resident if K grid==1)
                pl.BlockSpec((1, NCp), lambda i, k: (0, 0)),        # bias (f32)
                pl.BlockSpec((bt, NCp), lambda i, k: (i, 0)),       # targets (bf16)
            ],
            out_specs=[
                pl.BlockSpec((bt, STATS_LANES), lambda i, k: (i, 0)),
                pl.BlockSpec((bt, NCp), lambda i, k: (i, 0)),
            ],
            scratch_shapes=[pltpu.VMEM((bt, NCp), jnp.float32)],    # logits accumulator/scratch
        ),
        compiler_params=pltpu.CompilerParams(
            dimension_semantics=("parallel", "arbitrary"),
            vmem_limit_bytes=VMEM_LIMIT,
        ),
    )(x_p, w_p, b_p, y_p)

    outputs = stats[:B, 0:1]                                # per-sample loss
    weights = stats[:B, 1:2]                                # rank weights
    pred_prob_list = probs[:B, :NC].astype(jnp.float32)     # restore f32 interface dtype
    return outputs, weights, pred_prob_list


if __name__ == "__main__":
    key = jax.random.PRNGKey(0)
    k_x, k_w, k_b, k_y = jax.random.split(key, 4)

    B, C, H, W = 2, 4, 16, 16
    D = C * H * W
    NC = 16          # number of labels / classes
    MARGIN = 1.0

    x = jax.random.normal(k_x, (B, C, H, W), dtype=jnp.float32)

    # deterministic synthetic "net" parameters (linear classifier)
    params = {
        "w": jax.random.normal(k_w, (D, NC), dtype=jnp.float32) * 0.02,
        "b": jax.random.normal(k_b, (1, NC), dtype=jnp.float32) * 0.01,
    }

    # multi-hot targets; guarantee at least one positive and one negative per row
    y = (jax.random.uniform(k_y, (B, NC)) < 0.3).astype(jnp.float32)
    y = y.at[:, 0].set(1.0).at[:, 1].set(0.0)

    # inference-only path (calc_loss=False)
    logits_only = warp_loss_forward(x, y, params, MARGIN, calc_loss=False)
    jax.block_until_ready(logits_only)

    # full path: (outputs, weights, pred_prob_list)
    outputs, weights, pred_prob_list = warp_loss_forward(x, y, params, MARGIN, calc_loss=True)
    jax.block_until_ready((outputs, weights, pred_prob_list))

    assert logits_only.shape == (B, NC)
    assert outputs.shape == (B, 1)
    assert weights.shape == (B, 1)
    assert pred_prob_list.shape == (B, NC)
    assert bool(jnp.all(jnp.isfinite(outputs)))
    assert bool(jnp.all(jnp.isfinite(weights)))
    assert bool(jnp.all(jnp.isfinite(pred_prob_list)))

    print("KERNEL_OK")
</pallas_src>

<mosaic_0001>
module attributes {stable_mosaic.version = 11 : i64} {
  func.func @_linear_kernel(%arg0: i32, %arg1: i32, %arg2: memref<8x1024xbf16, #tpu.memory_space<vmem>>, %arg3: memref<1024x128xbf16, #tpu.memory_space<vmem>>, %arg4: memref<1x128xf32, #tpu.memory_space<vmem>>, %arg5: memref<8x128xf32, #tpu.memory_space<vmem>>, %arg6: memref<8x128xf32, #tpu.memory_space<vmem>>) attributes {dimension_semantics = [#tpu.dimension_semantics<parallel>, #tpu.dimension_semantics<arbitrary>], iteration_bounds = array<i64: 1, 1>, scalar_prefetch = 0 : i64, scratch_operands = 1 : i64, tpu.core_type = #tpu.core_type<tc>, window_params = [{transform_indices = @transform_0, window_bounds = array<i64: 8, 1024>}, {transform_indices = @transform_1, window_bounds = array<i64: 1024, 128>}, {pipeline_mode = #tpu.pipeline_mode<synchronous>, transform_indices = @transform_2, window_bounds = array<i64: 1, 128>}, {transform_indices = @transform_3, window_bounds = array<i64: 8, 128>}]} {
    %c0_i32 = arith.constant 0 : i32
    %0 = arith.cmpi eq, %arg1, %c0_i32 : i32
    %1 = arith.extui %0 : i1 to i32
    %c0_i32_0 = arith.constant 0 : i32
    %2 = arith.cmpi ne, %1, %c0_i32_0 : i32
    scf.if %2 {
      %cst_10 = arith.constant 0.000000e+00 : f32
      %12 = vector.broadcast %cst_10 : f32 to vector<8x128xf32>
      %c0_11 = arith.constant 0 : index
      %c0_12 = arith.constant 0 : index
      %13 = vector.load %arg6[%c0_11, %c0_12] : memref<8x128xf32, #tpu.memory_space<vmem>>, vector<8x128xf32>
      tpu.vector_store %arg6[%c0_11, %c0_12], %12 {strides = array<i32>} : memref<8x128xf32, #tpu.memory_space<vmem>>, vector<8x128xf32>,
    } else {
    }
    %c0 = arith.constant 0 : index
    %c0_1 = arith.constant 0 : index
    %3 = vector.load %arg6[%c0, %c0_1] : memref<8x128xf32, #tpu.memory_space<vmem>>, vector<8x128xf32>
    %c0_2 = arith.constant 0 : index
    %c0_3 = arith.constant 0 : index
    %4 = vector.load %arg2[%c0_2, %c0_3] : memref<8x1024xbf16, #tpu.memory_space<vmem>>, vector<8x1024xbf16>
    %c0_4 = arith.constant 0 : index
    %c0_5 = arith.constant 0 : index
    %5 = vector.load %arg3[%c0_4, %c0_5] : memref<1024x128xbf16, #tpu.memory_space<vmem>>, vector<1024x128xbf16>
    %cst = arith.constant dense<0.000000e+00> : vector<8x128xf32>
    %6 = tpu.matmul %4, %5, %cst {dimension_numbers = #tpu.dot_dimension_numbers<[1], [0], [0], [1], [0, 0, 1, 1], [], []>} : vector<8x1024xbf16>, vector<1024x128xbf16>, vector<8x128xf32> -> vector<8x128xf32>
    %7 = arith.addf %3, %6 : vector<8x128xf32>
    %c0_6 = arith.constant 0 : index
    %c0_7 = arith.constant 0 : index
    %8 = vector.load %arg6[%c0_6, %c0_7] : memref<8x128xf32, #tpu.memory_space<vmem>>, vector<8x128xf32>
    tpu.vector_store %arg6[%c0_6, %c0_7], %7 {strides = array<i32>} : memref<8x128xf32, #tpu.memory_space<vmem>>, vector<8x128xf32>,
    %c0_i32_8 = arith.constant 0 : i32
    %9 = arith.cmpi eq, %arg1, %c0_i32_8 : i32
    %10 = arith.extui %9 : i1 to i32
    %c0_i32_9 = arith.constant 0 : i32
    %11 = arith.cmpi ne, %10, %c0_i32_9 : i32
    scf.if %11 {
      %c0_10 = arith.constant 0 : index
      %c0_11 = arith.constant 0 : index
      %12 = vector.load %arg6[%c0_10, %c0_11] : memref<8x128xf32, #tpu.memory_space<vmem>>, vector<8x128xf32>
      %c0_12 = arith.constant 0 : index
      %c0_13 = arith.constant 0 : index
      %13 = vector.load %arg4[%c0_12, %c0_13] : memref<1x128xf32, #tpu.memory_space<vmem>>, vector<1x128xf32>
      %14 = vector.broadcast %13 : vector<1x128xf32> to vector<8x128xf32>
      %15 = arith.addf %12, %14 : vector<8x128xf32>
      %c0_14 = arith.constant 0 : index
      %c0_15 = arith.constant 0 : index
      %16 = vector.load %arg5[%c0_14, %c0_15] : memref<8x128xf32, #tpu.memory_space<vmem>>, vector<8x128xf32>
      tpu.vector_store %arg5[%c0_14, %c0_15], %15 {strides = array<i32>} : memref<8x128xf32, #tpu.memory_space<vmem>>, vector<8x128xf32>,
    } else {
    }
    return
  }
  func.func @transform_0(%arg0: i32, %arg1: i32) -> (i32, i32) {
    %c0_i32 = arith.constant 0 : i32
    return %arg0, %arg1 : i32, i32
  }
  func.func @transform_1(%arg0: i32, %arg1: i32) -> (i32, i32) {
    %c0_i32 = arith.constant 0 : i32
    %c0_i32_0 = arith.constant 0 : i32
    return %arg1, %c0_i32 : i32, i32
  }
  func.func @transform_2(%arg0: i32, %arg1: i32) -> (i32, i32) {
    %c0_i32 = arith.constant 0 : i32
    %c0_i32_0 = arith.constant 0 : i32
    %c0_i32_1 = arith.constant 0 : i32
    return %c0_i32, %c0_i32_0 : i32, i32
  }
  func.func @transform_3(%arg0: i32, %arg1: i32) -> (i32, i32) {
    %c0_i32 = arith.constant 0 : i32
    %c0_i32_0 = arith.constant 0 : i32
    return %arg0, %c0_i32 : i32, i32
  }
}

</mosaic_0001>

<llo_original>
// kernel: tpu_custom_call.1
$region0: #{tpu_custom_call.1}
  #allocation0 [shape = 'u32[]', space=smem, size = 0x4, offset = 0x4, fixed_abs, tag = 'smem constant byte address 0x4 - core index']
  #allocation1 [shape = 'u32[72,128]{1,0:T(1,128)}', space=vmem, size = 0x9000, scoped, tag = 'internal scratch']
  #allocation2 [shape = 'f32[8,128]{1,0:T(8,128)}', space=vmem, size = 0x1000, scoped, tag = 'scratch operand']
  %s0 = inlined_call_operand.hbm [shape: bf16[8,1024], index: 0, kind: input, shape index: {}]
  %s1 = inlined_call_operand.hbm [shape: bf16[1024,128], index: 1, kind: input, shape index: {}]
  %s2 = inlined_call_operand.vmem [shape: f32[1,128], index: 2, kind: input, shape index: {}]
  %s3 = inlined_call_operand.hbm [shape: f32[8,128], index: 3, kind: output, shape index: {}]
  %s4 = sld [smem:[#allocation0]]
  $region38: #{tpu_custom_call.1} parent=0
    _
  %s6 = ssub.s32 1, %s4
  %s7 = scalar_select 0, %s6, %s4
  $region1: #{tpu_custom_call.1} parent=0
    #allocation3 [shape = 'u8[16384]{0}', space=vmem, size = 0x4000, scoped, tag = 'input window, operand 0, single buffered']
    #allocation4 [shape = 's32[1]{0}', space=sflag, size = 0x4, scoped, tag = 'scoped memory for tpu_custom_call.1']
    #allocation5 [shape = 's32[1]{0}', space=sflag, size = 0x4, scoped, tag = 'scoped memory for tpu_custom_call.1']
    #allocation6 [shape = 'u8[262144]{0}', space=vmem, size = 0x40000, scoped, tag = 'input window, operand 1, single buffered']
    #allocation7 [shape = 's32[1]{0}', space=sflag, size = 0x4, scoped, tag = 'scoped memory for tpu_custom_call.1']
    #allocation8 [shape = 'u8[4096]{0}', space=vmem, size = 0x1000, scoped, tag = 'output window, operand 0, single buffered']
    %8 = vsyncpa [#allocation4], 0
    %9 = vsyncpa [#allocation7], 0
    %10 = vsyncpa [#allocation5], 0
    // Predicated region
    $region2: #{tpu_custom_call.1} parent=1 // pred_check
      _
    $region3: #{tpu_custom_call.1} parent=1 // pred_check_branch
      %12 = sbr.rel (0) target = $region5
    $region4: #{tpu_custom_call.1} parent=1 // pred_region
      %14 = vsyncadd [#allocation4], 0
      %s16 = sshll.u32 %s0, 4
      %s17 = int_to_ptr.hbm [resolvable:$true] %s16
      %s18 = sshll.u32 [#allocation3], 4
      %s19 = int_to_ptr.vmem [resolvable:$true] %s18
      %21 = dma.hbm_to_vmem [thread:$0]  %s17, 512, %s19, [#allocation4]
    $region5: #{tpu_custom_call.1} parent=1 // pred_fallthru
      _
    // Predicated region
    $region6: #{tpu_custom_call.1} parent=1 // pred_check
      _
    $region7: #{tpu_custom_call.1} parent=1 // pred_check_branch
      %23 = sbr.rel (0) target = $region9
    $region8: #{tpu_custom_call.1} parent=1 // pred_region
      %25 = vsyncadd [#allocation7], 0
      %s26 = sshll.u32 %s1, 4
      %s27 = int_to_ptr.hbm [resolvable:$true] %s26
      %s28 = sshll.u32 [#allocation6], 4
      %s29 = int_to_ptr.vmem [resolvable:$true] %s28
      %34 = dma.hbm_to_vmem [thread:$0]  %s27, 8192, %s29, [#allocation7], 64, 64, 4
    $region9: #{tpu_custom_call.1} parent=1 // pred_fallthru
      _
    // Predicated region
    $region10: #{tpu_custom_call.1} parent=1 // pred_check
      _
    $region11: #{tpu_custom_call.1} parent=1 // pred_check_branch
      %36 = sbr.rel (0) target = $region13
    $region12: #{tpu_custom_call.1} parent=1 // pred_region
      _
    $region13: #{tpu_custom_call.1} parent=1 // pred_fallthru
      _
    // Predicated region
    $region14: #{tpu_custom_call.1} parent=1 // pred_check
      _
    $region15: #{tpu_custom_call.1} parent=1 // pred_check_branch
      %38 = sbr.rel (0) target = $region17
    $region16: #{tpu_custom_call.1} parent=1 // pred_region
      %40 = dma.done [#allocation4], 512
    $region17: #{tpu_custom_call.1} parent=1 // pred_fallthru
      _
    // Predicated region
    $region18: #{tpu_custom_call.1} parent=1 // pred_check
      _
    $region19: #{tpu_custom_call.1} parent=1 // pred_check_branch
      %42 = sbr.rel (0) target = $region21
    $region20: #{tpu_custom_call.1} parent=1 // pred_region
      %44 = dma.done [#allocation7], 8192
    $region21: #{tpu_custom_call.1} parent=1 // pred_fallthru
      _
    %p45 = scmp.eq.s32.totalorder 0, 0
    // Predicated region
    $region22: #{tpu_custom_call.1} parent=1 // pred_check
      %p46 = pneg %p45
    $region23: #{tpu_custom_call.1} parent=1 // pred_check_branch
      %48 = sbr.rel (%p46) target = $region25
    $region24: #{tpu_custom_call.1} parent=1 // pred_region
      %49 = vst [vmem:[#allocation2] sm:$0xff] 0.0
    $region25: #{tpu_custom_call.1} parent=1 // pred_fallthru
      _
    %v50 = vld [vmem:[#allocation2] sm:$0xff]
    %v51 = vld [vmem:[#allocation3] sm:$0xff]
    %v52 = vld [vmem:[#allocation3 + $0x8] sm:$0xff]
    %v53 = vld [vmem:[#allocation3 + $0x10] sm:$0xff]
    %v54 = vld [vmem:[#allocation3 + $0x18] sm:$0xff]
    %v55 = vld [vmem:[#allocation6] sm:$0xf]
    %v56 = vld [vmem:[#allocation6 + $0x4] sm:$0xf]
    %v57 = vld [vmem:[#allocation6 + $0x8] sm:$0xf]
    %v58 = vld [vmem:[#allocation6 + $0xc] sm:$0xf]
    %v59 = vld [vmem:[#allocation6 + $0x10] sm:$0xf]
    %v60 = vld [vmem:[#allocation6 + $0x14] sm:$0xf]
    %v61 = vld [vmem:[#allocation6 + $0x18] sm:$0xf]
    %v62 = vld [vmem:[#allocation6 + $0x1c] sm:$0xf]
    %v63 = vld [vmem:[#allocation6 + $0x20] sm:$0xf]
    %v64 = vld [vmem:[#allocation6 + $0x24] sm:$0xf]
    %v65 = vld [vmem:[#allocation6 + $0x28] sm:$0xf]
    %v66 = vld [vmem:[#allocation6 + $0x2c] sm:$0xf]
    %v67 = vld [vmem:[#allocation6 + $0x30] sm:$0xf]
    %v68 = vld [vmem:[#allocation6 + $0x34] sm:$0xf]
    %v69 = vld [vmem:[#allocation6 + $0x38] sm:$0xf]
    %v70 = vld [vmem:[#allocation6 + $0x3c] sm:$0xf]
    %v71 = vld [vmem:[#allocation6 + $0x40] sm:$0xf]
    %v72 = vld [vmem:[#allocation6 + $0x44] sm:$0xf]
    %v73 = vld [vmem:[#allocation6 + $0x48] sm:$0xf]
    %v74 = vld [vmem:[#allocation6 + $0x4c] sm:$0xf]
    %v75 = vld [vmem:[#allocation6 + $0x50] sm:$0xf]
    %v76 = vld [vmem:[#allocation6 + $0x54] sm:$0xf]
    %v77 = vld [vmem:[#allocation6 + $0x58] sm:$0xf]
    %v78 = vld [vmem:[#allocation6 + $0x5c] sm:$0xf]
    %v79 = vld [vmem:[#allocation6 + $0x60] sm:$0xf]
    %v80 = vld [vmem:[#allocation6 + $0x64] sm:$0xf]
    %v81 = vld [vmem:[#allocation6 + $0x68] sm:$0xf]
    %v82 = vld [vmem:[#allocation6 + $0x6c] sm:$0xf]
    %v83 = vld [vmem:[#allocation6 + $0x70] sm:$0xf]
    %v84 = vld [vmem:[#allocation6 + $0x74] sm:$0xf]
    %v85 = vld [vmem:[#allocation6 + $0x78] sm:$0xf]
    %v86 = vld [vmem:[#allocation6 + $0x7c] sm:$0xf]
    %v87 = vld [vmem:[#allocation6 + $0x80] sm:$0xf]
    %v88 = vld [vmem:[#allocation6 + $0x84] sm:$0xf]
    %v89 = vld [vmem:[#allocation6 + $0x88] sm:$0xf]
    %v90 = vld [vmem:[#allocation6 + $0x8c] sm:$0xf]
    %v91 = vld [vmem:[#allocation6 + $0x90] sm:$0xf]
    %v92 = vld [vmem:[#allocation6 + $0x94] sm:$0xf]
    %v93 = vld [vmem:[#allocation6 + $0x98] sm:$0xf]
    %v94 = vld [vmem:[#allocation6 + $0x9c] sm:$0xf]
    %v95 = vld [vmem:[#allocation6 + $0xa0] sm:$0xf]
    %v96 = vld [vmem:[#allocation6 + $0xa4] sm:$0xf]
    %v97 = vld [vmem:[#allocation6 + $0xa8] sm:$0xf]
    %v98 = vld [vmem:[#allocation6 + $0xac] sm:$0xf]
    %v99 = vld [vmem:[#allocation6 + $0xb0] sm:$0xf]
    %v100 = vld [vmem:[#allocation6 + $0xb4] sm:$0xf]
    %v101 = vld [vmem:[#allocation6 + $0xb8] sm:$0xf]
    %v102 = vld [vmem:[#allocation6 + $0xbc] sm:$0xf]
    %v103 = vld [vmem:[#allocation6 + $0xc0] sm:$0xf]
    %v104 = vld [vmem:[#allocation6 + $0xc4] sm:$0xf]
    %v105 = vld [vmem:[#allocation6 + $0xc8] sm:$0xf]
    %v106 = vld [vmem:[#allocation6 + $0xcc] sm:$0xf]
    %v107 = vld [vmem:[#allocation6 + $0xd0] sm:$0xf]
    %v108 = vld [vmem:[#allocation6 + $0xd4] sm:$0xf]
    %v109 = vld [vmem:[#allocation6 + $0xd8] sm:$0xf]
    %v110 = vld [vmem:[#allocation6 + $0xdc] sm:$0xf]
    %v111 = vld [vmem:[#allocation6 + $0xe0] sm:$0xf]
    %v112 = vld [vmem:[#allocation6 + $0xe4] sm:$0xf]
    %v113 = vld [vmem:[#allocation6 + $0xe8] sm:$0xf]
    %v114 = vld [vmem:[#allocation6 + $0xec] sm:$0xf]
    %v115 = vld [vmem:[#allocation6 + $0xf0] sm:$0xf]
    %v116 = vld [vmem:[#allocation6 + $0xf4] sm:$0xf]
    %v117 = vld [vmem:[#allocation6 + $0xf8] sm:$0xf]
    %v118 = vld [vmem:[#allocation6 + $0xfc] sm:$0xf]
    %v119 = vld [vmem:[#allocation6 + $0x100] sm:$0xf]
    %v120 = vld [vmem:[#allocation6 + $0x104] sm:$0xf]
    %v121 = vld [vmem:[#allocation6 + $0x108] sm:$0xf]
    %v122 = vld [vmem:[#allocation6 + $0x10c] sm:$0xf]
    %v123 = vld [vmem:[#allocation6 + $0x110] sm:$0xf]
    %v124 = vld [vmem:[#allocation6 + $0x114] sm:$0xf]
    %v125 = vld [vmem:[#allocation6 + $0x118] sm:$0xf]
    %v126 = vld [vmem:[#allocation6 + $0x11c] sm:$0xf]
    %v127 = vld [vmem:[#allocation6 + $0x120] sm:$0xf]
    %v128 = vld [vmem:[#allocation6 + $0x124] sm:$0xf]
    %v129 = vld [vmem:[#allocation6 + $0x128] sm:$0xf]
    %v130 = vld [vmem:[#allocation6 + $0x12c] sm:$0xf]
    %v131 = vld [vmem:[#allocation6 + $0x130] sm:$0xf]
    %v132 = vld [vmem:[#allocation6 + $0x134] sm:$0xf]
    %v133 = vld [vmem:[#allocation6 + $0x138] sm:$0xf]
    %v134 = vld [vmem:[#allocation6 + $0x13c] sm:$0xf]
    %v135 = vld [vmem:[#allocation6 + $0x140] sm:$0xf]
    %v136 = vld [vmem:[#allocation6 + $0x144] sm:$0xf]
    %v137 = vld [vmem:[#allocation6 + $0x148] sm:$0xf]
    %v138 = vld [vmem:[#allocation6 + $0x14c] sm:$0xf]
    %v139 = vld [vmem:[#allocation6 + $0x150] sm:$0xf]
    %v140 = vld [vmem:[#allocation6 + $0x154] sm:$0xf]
    %v141 = vld [vmem:[#allocation6 + $0x158] sm:$0xf]
    %v142 = vld [vmem:[#allocation6 + $0x15c] sm:$0xf]
    %v143 = vld [vmem:[#allocation6 + $0x160] sm:$0xf]
    %v144 = vld [vmem:[#allocation6 + $0x164] sm:$0xf]
    %v145 = vld [vmem:[#allocation6 + $0x168] sm:$0xf]
    %v146 = vld [vmem:[#allocation6 + $0x16c] sm:$0xf]
    %v147 = vld [vmem:[#allocation6 + $0x170] sm:$0xf]
    %v148 = vld [vmem:[#allocation6 + $0x174] sm:$0xf]
    %v149 = vld [vmem:[#allocation6 + $0x178] sm:$0xf]
    %v150 = vld [vmem:[#allocation6 + $0x17c] sm:$0xf]
    %v151 = vld [vmem:[#allocation6 + $0x180] sm:$0xf]
    %v152 = vld [vmem:[#allocation6 + $0x184] sm:$0xf]
    %v153 = vld [vmem:[#allocation6 + $0x188] sm:$0xf]
    %v154 = vld [vmem:[#allocation6 + $0x18c] sm:$0xf]
    %v155 = vld [vmem:[#allocation6 + $0x190] sm:$0xf]
    %v156 = vld [vmem:[#allocation6 + $0x194] sm:$0xf]
    %v157 = vld [vmem:[#allocation6 + $0x198] sm:$0xf]
    %v158 = vld [vmem:[#allocation6 + $0x19c] sm:$0xf]
    %v159 = vld [vmem:[#allocation6 + $0x1a0] sm:$0xf]
    %v160 = vld [vmem:[#allocation6 + $0x1a4] sm:$0xf]
    %v161 = vld [vmem:[#allocation6 + $0x1a8] sm:$0xf]
    %v162 = vld [vmem:[#allocation6 + $0x1ac] sm:$0xf]
    %v163 = vld [vmem:[#allocation6 + $0x1b0] sm:$0xf]
    %v164 = vld [vmem:[#allocation6 + $0x1b4] sm:$0xf]
    %v165 = vld [vmem:[#allocation6 + $0x1b8] sm:$0xf]
    %v166 = vld [vmem:[#allocation6 + $0x1bc] sm:$0xf]
    %v167 = vld [vmem:[#allocation6 + $0x1c0] sm:$0xf]
    %v168 = vld [vmem:[#allocation6 + $0x1c4] sm:$0xf]
    %v169 = vld [vmem:[#allocation6 + $0x1c8] sm:$0xf]
    %v170 = vld [vmem:[#allocation6 + $0x1cc] sm:$0xf]
    %v171 = vld [vmem:[#allocation6 + $0x1d0] sm:$0xf]
    %v172 = vld [vmem:[#allocation6 + $0x1d4] sm:$0xf]
    %v173 = vld [vmem:[#allocation6 + $0x1d8] sm:$0xf]
    %v174 = vld [vmem:[#allocation6 + $0x1dc] sm:$0xf]
    %v175 = vld [vmem:[#allocation6 + $0x1e0] sm:$0xf]
    %v176 = vld [vmem:[#allocation6 + $0x1e4] sm:$0xf]
    %v177 = vld [vmem:[#allocation6 + $0x1e8] sm:$0xf]
    %v178 = vld [vmem:[#allocation6 + $0x1ec] sm:$0xf]
    %v179 = vld [vmem:[#allocation6 + $0x1f0] sm:$0xf]
    %v180 = vld [vmem:[#allocation6 + $0x1f4] sm:$0xf]
    %v181 = vld [vmem:[#allocation6 + $0x1f8] sm:$0xf]
    %v182 = vld [vmem:[#allocation6 + $0x1fc] sm:$0xf]
    %v187 = vunpack.c.l.b16 %v51
    %v188 = vunpack.c.h.b16 %v51
    %v189 = vunpack.c.l.b16 %v52
    %v190 = vunpack.c.h.b16 %v52
    %v191 = vunpack.c.l.b16 %v53
    %v192 = vunpack.c.h.b16 %v53
    %v193 = vunpack.c.l.b16 %v54
    %v194 = vunpack.c.h.b16 %v54
    %v195 = vpack.c.b16 %v187, %v187
    %v196 = vpack.c.b16 %v188, %v188
    %v197 = vpack.c.b16 %v189, %v189
    %v198 = vpack.c.b16 %v190, %v190
    %v199 = vpack.c.b16 %v191, %v191
    %v200 = vpack.c.b16 %v192, %v192
    %v201 = vpack.c.b16 %v193, %v193
    %v202 = vpack.c.b16 %v194, %v194
    %v339 = vunpack.c.l.b16 %v55
    %v340 = vunpack.c.l.b16 %v56
    %v341 = vunpack.c.l.b16 %v57
    %v342 = vunpack.c.l.b16 %v58
    %v343 = vunpack.c.l.b16 %v59
    %v344 = vunpack.c.l.b16 %v60
    %v345 = vunpack.c.l.b16 %v61
    %v346 = vunpack.c.l.b16 %v62
    %v347 = vunpack.c.l.b16 %v63
    %v348 = vunpack.c.l.b16 %v64
    %v349 = vunpack.c.l.b16 %v65
    %v350 = vunpack.c.l.b16 %v66
    %v351 = vunpack.c.l.b16 %v67
    %v352 = vunpack.c.l.b16 %v68
    %v353 = vunpack.c.l.b16 %v69
    %v354 = vunpack.c.l.b16 %v70
    %v355 = vunpack.c.l.b16 %v71
    %v356 = vunpack.c.l.b16 %v72
    %v357 = vunpack.c.l.b16 %v73
    %v358 = vunpack.c.l.b16 %v74
    %v359 = vunpack.c.l.b16 %v75
    %v360 = vunpack.c.l.b16 %v76
    %v361 = vunpack.c.l.b16 %v77
    %v362 = vunpack.c.l.b16 %v78
    %v363 = vunpack.c.l.b16 %v79
    %v364 = vunpack.c.l.b16 %v80
    %v365 = vunpack.c.l.b16 %v81
    %v366 = vunpack.c.l.b16 %v82
    %v367 = vunpack.c.l.b16 %v83
    %v368 = vunpack.c.l.b16 %v84
    %v369 = vunpack.c.l.b16 %v85
    %v370 = vunpack.c.l.b16 %v86
    %v371 = vunpack.c.l.b16 %v87
    %v372 = vunpack.c.l.b16 %v88
    %v373 = vunpack.c.l.b16 %v89
    %v374 = vunpack.c.l.b16 %v90
    %v375 = vunpack.c.l.b16 %v91
    %v376 = vunpack.c.l.b16 %v92
    %v377 = vunpack.c.l.b16 %v93
    %v378 = vunpack.c.l.b16 %v94
    %v379 = vunpack.c.l.b16 %v95
    %v380 = vunpack.c.l.b16 %v96
    %v381 = vunpack.c.l.b16 %v97
    %v382 = vunpack.c.l.b16 %v98
    %v383 = vunpack.c.l.b16 %v99
    %v384 = vunpack.c.l.b16 %v100
    %v385 = vunpack.c.l.b16 %v101
    %v386 = vunpack.c.l.b16 %v102
    %v387 = vunpack.c.l.b16 %v103
    %v388 = vunpack.c.l.b16 %v104
    %v389 = vunpack.c.l.b16 %v105
    %v390 = vunpack.c.l.b16 %v106
    %v391 = vunpack.c.l.b16 %v107
    %v392 = vunpack.c.l.b16 %v108
    %v393 = vunpack.c.l.b16 %v109
    %v394 = vunpack.c.l.b16 %v110
    %v395 = vunpack.c.l.b16 %v111
    %v396 = vunpack.c.l.b16 %v112
    %v397 = vunpack.c.l.b16 %v113
    %v398 = vunpack.c.l.b16 %v114
    %v399 = vunpack.c.l.b16 %v115
    %v400 = vunpack.c.l.b16 %v116
    %v401 = vunpack.c.l.b16 %v117
    %v402 = vunpack.c.l.b16 %v118
    %v403 = vunpack.c.l.b16 %v119
    %v404 = vunpack.c.l.b16 %v120
    %v405 = vunpack.c.l.b16 %v121
    %v406 = vunpack.c.l.b16 %v122
    %v407 = vunpack.c.l.b16 %v123
    %v408 = vunpack.c.l.b16 %v124
    %v409 = vunpack.c.l.b16 %v125
    %v410 = vunpack.c.l.b16 %v126
    %v411 = vunpack.c.l.b16 %v127
    %v412 = vunpack.c.l.b16 %v128
    %v413 = vunpack.c.l.b16 %v129
    %v414 = vunpack.c.l.b16 %v130
    %v415 = vunpack.c.l.b16 %v131
    %v416 = vunpack.c.l.b16 %v132
    %v417 = vunpack.c.l.b16 %v133
    %v418 = vunpack.c.l.b16 %v134
    %v419 = vunpack.c.l.b16 %v135
    %v420 = vunpack.c.l.b16 %v136
    %v421 = vunpack.c.l.b16 %v137
    %v422 = vunpack.c.l.b16 %v138
    %v423 = vunpack.c.l.b16 %v139
    %v424 = vunpack.c.l.b16 %v140
    %v425 = vunpack.c.l.b16 %v141
    %v426 = vunpack.c.l.b16 %v142
    %v427 = vunpack.c.l.b16 %v143
    %v428 = vunpack.c.l.b16 %v144
    %v429 = vunpack.c.l.b16 %v145
    %v430 = vunpack.c.l.b16 %v146
    %v431 = vunpack.c.l.b16 %v147
    %v432 = vunpack.c.l.b16 %v148
    %v433 = vunpack.c.l.b16 %v149
    %v434 = vunpack.c.l.b16 %v150
    %v435 = vunpack.c.l.b16 %v151
    %v436 = vunpack.c.l.b16 %v152
    %v437 = vunpack.c.l.b16 %v153
    %v438 = vunpack.c.l.b16 %v154
    %v439 = vunpack.c.l.b16 %v155
    %v440 = vunpack.c.l.b16 %v156
    %v441 = vunpack.c.l.b16 %v157
    %v442 = vunpack.c.l.b16 %v158
    %v443 = vunpack.c.l.b16 %v159
    %v444 = vunpack.c.l.b16 %v160
    %v445 = vunpack.c.l.b16 %v161
    %v446 = vunpack.c.l.b16 %v162
    %v447 = vunpack.c.l.b16 %v163
    %v448 = vunpack.c.l.b16 %v164
    %v449 = vunpack.c.l.b16 %v165
    %v450 = vunpack.c.l.b16 %v166
    %v451 = vunpack.c.l.b16 %v167
    %v452 = vunpack.c.l.b16 %v168
    %v453 = vunpack.c.l.b16 %v169
    %v454 = vunpack.c.l.b16 %v170
    %v455 = vunpack.c.l.b16 %v171
    %v456 = vunpack.c.l.b16 %v172
    %v457 = vunpack.c.l.b16 %v173
    %v458 = vunpack.c.l.b16 %v174
    %v459 = vunpack.c.l.b16 %v175
    %v460 = vunpack.c.l.b16 %v176
    %v461 = vunpack.c.l.b16 %v177
    %v462 = vunpack.c.l.b16 %v178
    %v463 = vunpack.c.l.b16 %v179
    %v464 = vunpack.c.l.b16 %v180
    %v465 = vunpack.c.l.b16 %v181
    %v466 = vunpack.c.l.b16 %v182
    %v467 = vpack.c.b16 %v340, %v339
    %v468 = vpack.c.b16 %v342, %v341
    %v469 = vpack.c.b16 %v344, %v343
    %v470 = vpack.c.b16 %v346, %v345
    %v471 = vpack.c.b16 %v348, %v347
    %v472 = vpack.c.b16 %v350, %v349
    %v473 = vpack.c.b16 %v352, %v351
    %v474 = vpack.c.b16 %v354, %v353
    %v475 = vpack.c.b16 %v356, %v355
    %v476 = vpack.c.b16 %v358, %v357
    %v477 = vpack.c.b16 %v360, %v359
    %v478 = vpack.c.b16 %v362, %v361
    %v479 = vpack.c.b16 %v364, %v363
    %v480 = vpack.c.b16 %v366, %v365
    %v481 = vpack.c.b16 %v368, %v367
    %v482 = vpack.c.b16 %v370, %v369
    %v483 = vpack.c.b16 %v372, %v371
    %v484 = vpack.c.b16 %v374, %v373
    %v485 = vpack.c.b16 %v376, %v375
    %v486 = vpack.c.b16 %v378, %v377
    %v487 = vpack.c.b16 %v380, %v379
    %v488 = vpack.c.b16 %v382, %v381
    %v489 = vpack.c.b16 %v384, %v383
    %v490 = vpack.c.b16 %v386, %v385
    %v491 = vpack.c.b16 %v388, %v387
    %v492 = vpack.c.b16 %v390, %v389
    %v493 = vpack.c.b16 %v392, %v391
    %v494 = vpack.c.b16 %v394, %v393
    %v495 = vpack.c.b16 %v396, %v395
    %v496 = vpack.c.b16 %v398, %v397
    %v497 = vpack.c.b16 %v400, %v399
    %v498 = vpack.c.b16 %v402, %v401
    %v499 = vpack.c.b16 %v404, %v403
    %v500 = vpack.c.b16 %v406, %v405
    %v501 = vpack.c.b16 %v408, %v407
    %v502 = vpack.c.b16 %v410, %v409
    %v503 = vpack.c.b16 %v412, %v411
    %v504 = vpack.c.b16 %v414, %v413
    %v505 = vpack.c.b16 %v416, %v415
    %v506 = vpack.c.b16 %v418, %v417
    %v507 = vpack.c.b16 %v420, %v419
    %v508 = vpack.c.b16 %v422, %v421
    %v509 = vpack.c.b16 %v424, %v423
    %v510 = vpack.c.b16 %v426, %v425
    %v511 = vpack.c.b16 %v428, %v427
    %v512 = vpack.c.b16 %v430, %v429
    %v513 = vpack.c.b16 %v432, %v431
    %v514 = vpack.c.b16 %v434, %v433
    %v515 = vpack.c.b16 %v436, %v435
    %v516 = vpack.c.b16 %v438, %v437
    %v517 = vpack.c.b16 %v440, %v439
    %v518 = vpack.c.b16 %v442, %v441
    %v519 = vpack.c.b16 %v444, %v443
    %v520 = vpack.c.b16 %v446, %v445
    %v521 = vpack.c.b16 %v448, %v447
    %v522 = vpack.c.b16 %v450, %v449
    %v523 = vpack.c.b16 %v452, %v451
    %v524 = vpack.c.b16 %v454, %v453
    %v525 = vpack.c.b16 %v456, %v455
    %v526 = vpack.c.b16 %v458, %v457
    %v527 = vpack.c.b16 %v460, %v459
    %v528 = vpack.c.b16 %v462, %v461
    %v529 = vpack.c.b16 %v464, %v463
    %v530 = vpack.c.b16 %v466, %v465
    %595 = vmatpush.bf16.msra.mxu0 %v474
    %596 = vmatpush.bf16.msra.mxu0 %v473
    %597 = vmatpush.bf16.msra.mxu0 %v472
    %598 = vmatpush.bf16.msra.mxu0 %v471
    %599 = vmatpush.bf16.msra.mxu0 %v470
    %600 = vmatpush.bf16.msra.mxu0 %v469
    %601 = vmatpush.bf16.msra.mxu0 %v468
    %602 = vmatpush.bf16.msra.mxu0 %v467
    %603 = vmatmul.bf16.gmra.mxu0 %v195
    %v604 = vpop.f32.mrf.mxu0
    %v605 = vadd.f32 0.0, %v604
    %v606 = vpop.f32.mrf.mxu0
    %607 = vdwg.mxu0
    %608 = vmatpush.bf16.msra.mxu0 %v482
    %609 = vmatpush.bf16.msra.mxu0 %v481
    %610 = vmatpush.bf16.msra.mxu0 %v480
    %611 = vmatpush.bf16.msra.mxu0 %v479
    %612 = vmatpush.bf16.msra.mxu0 %v478
    %613 = vmatpush.bf16.msra.mxu0 %v477
    %614 = vmatpush.bf16.msra.mxu0 %v476
    %615 = vmatpush.bf16.msra.mxu0 %v475
    %616 = vmatmul.bf16.gmra.mxu0 %v196
    %v617 = vpop.f32.mrf.mxu0
    %v618 = vadd.f32 %v605, %v617
    %v619 = vpop.f32.mrf.mxu0
    %620 = vdwg.mxu0
    %621 = vmatpush.bf16.msra.mxu0 %v490
    %622 = vmatpush.bf16.msra.mxu0 %v489
    %623 = vmatpush.bf16.msra.mxu0 %v488
    %624 = vmatpush.bf16.msra.mxu0 %v487
    %625 = vmatpush.bf16.msra.mxu0 %v486
    %626 = vmatpush.bf16.msra.mxu0 %v485
    %627 = vmatpush.bf16.msra.mxu0 %v484
    %628 = vmatpush.bf16.msra.mxu0 %v483
    %629 = vmatmul.bf16.gmra.mxu0 %v197
    %v630 = vpop.f32.mrf.mxu0
    %v631 = vadd.f32 %v618, %v630
    %v632 = vpop.f32.mrf.mxu0
    %633 = vdwg.mxu0
    %634 = vmatpush.bf16.msra.mxu0 %v498
    %635 = vmatpush.bf16.msra.mxu0 %v497
    %636 = vmatpush.bf16.msra.mxu0 %v496
    %637 = vmatpush.bf16.msra.mxu0 %v495
    %638 = vmatpush.bf16.msra.mxu0 %v494
    %639 = vmatpush.bf16.msra.mxu0 %v493
    %640 = vmatpush.bf16.msra.mxu0 %v492
    %641 = vmatpush.bf16.msra.mxu0 %v491
    %642 = vmatmul.bf16.gmra.mxu0 %v198
    %v643 = vpop.f32.mrf.mxu0
    %v644 = vadd.f32 %v631, %v643
    %v645 = vpop.f32.mrf.mxu0
    %646 = vdwg.mxu0
    %647 = vmatpush.bf16.msra.mxu0 %v506
    %648 = vmatpush.bf16.msra.mxu0 %v505
    %649 = vmatpush.bf16.msra.mxu0 %v504
    %650 = vmatpush.bf16.msra.mxu0 %v503
    %651 = vmatpush.bf16.msra.mxu0 %v502
    %652 = vmatpush.bf16.msra.mxu0 %v501
    %653 = vmatpush.bf16.msra.mxu0 %v500
    %654 = vmatpush.bf16.msra.mxu0 %v499
    %655 = vmatmul.bf16.gmra.mxu0 %v199
    %v656 = vpop.f32.mrf.mxu0
    %v657 = vadd.f32 %v644, %v656
    %v658 = vpop.f32.mrf.mxu0
    %659 = vdwg.mxu0
    %660 = vmatpush.bf16.msra.mxu0 %v514
    %661 = vmatpush.bf16.msra.mxu0 %v513
    %662 = vmatpush.bf16.msra.mxu0 %v512
    %663 = vmatpush.bf16.msra.mxu0 %v511
    %664 = vmatpush.bf16.msra.mxu0 %v510
    %665 = vmatpush.bf16.msra.mxu0 %v509
    %666 = vmatpush.bf16.msra.mxu0 %v508
    %667 = vmatpush.bf16.msra.mxu0 %v507
    %668 = vmatmul.bf16.gmra.mxu0 %v200
    %v669 = vpop.f32.mrf.mxu0
    %v670 = vadd.f32 %v657, %v669
    %v671 = vpop.f32.mrf.mxu0
    %672 = vdwg.mxu0
    %673 = vmatpush.bf16.msra.mxu0 %v522
    %674 = vmatpush.bf16.msra.mxu0 %v521
    %675 = vmatpush.bf16.msra.mxu0 %v520
    %676 = vmatpush.bf16.msra.mxu0 %v519
    %677 = vmatpush.bf16.msra.mxu0 %v518
    %678 = vmatpush.bf16.msra.mxu0 %v517
    %679 = vmatpush.bf16.msra.mxu0 %v516
    %680 = vmatpush.bf16.msra.mxu0 %v515
    %681 = vmatmul.bf16.gmra.mxu0 %v201
    %v682 = vpop.f32.mrf.mxu0
    %v683 = vadd.f32 %v670, %v682
    %v684 = vpop.f32.mrf.mxu0
    %685 = vdwg.mxu0
    %686 = vmatpush.bf16.msra.mxu0 %v530
    %687 = vmatpush.bf16.msra.mxu0 %v529
    %688 = vmatpush.bf16.msra.mxu0 %v528
    %689 = vmatpush.bf16.msra.mxu0 %v527
    %690 = vmatpush.bf16.msra.mxu0 %v526
    %691 = vmatpush.bf16.msra.mxu0 %v525
    %692 = vmatpush.bf16.msra.mxu0 %v524
    %693 = vmatpush.bf16.msra.mxu0 %v523
    %694 = vmatmul.bf16.gmra.mxu0 %v202
    %v695 = vpop.f32.mrf.mxu0
    %v696 = vadd.f32 %v683, %v695
    %v697 = vpop.f32.mrf.mxu0
    %698 = vdwg.mxu0
    %v699 = vadd.f32 %v50, %v696
    %700 = vst [vmem:[#allocation2] sm:$0xff] %v699
    // Predicated region
    $region26: #{tpu_custom_call.1} parent=1 // pred_check
      %p701 = pneg %p45
    $region27: #{tpu_custom_call.1} parent=1 // pred_check_branch
      %703 = sbr.rel (%p701) target = $region29
    $region28: #{tpu_custom_call.1} parent=1 // pred_region
      %v704 = vld [vmem:[#allocation2] sm:$0xff]
      %v705 = vld [vmem:[%s2] sm:$0x1]
      %v707 = vperm.slane %v705, 0
      %v709 = vadd.f32 %v704, %v707
      %710 = vst [vmem:[#allocation8] sm:$0xff] %v709
    $region29: #{tpu_custom_call.1} parent=1 // pred_fallthru
      _
    // Predicated region
    $region30: #{tpu_custom_call.1} parent=1 // pred_check
      _
    $region31: #{tpu_custom_call.1} parent=1 // pred_check_branch
      %712 = sbr.rel (0) target = $region33
    $region32: #{tpu_custom_call.1} parent=1 // pred_region
      %714 = vsyncadd [#allocation5], 0
      %s716 = sshll.u32 [#allocation8], 4
      %s717 = int_to_ptr.vmem [resolvable:$true] %s716
      %s718 = sshll.u32 %s3, 4
      %s719 = int_to_ptr.hbm [resolvable:$true] %s718
      %721 = dma.vmem_to_hbm [thread:$0]  %s717, 128, %s719, [#allocation5]
    $region33: #{tpu_custom_call.1} parent=1 // pred_fallthru
      _
    // Predicated region
    $region34: #{tpu_custom_call.1} parent=1 // pred_check
      _
    $region35: #{tpu_custom_call.1} parent=1 // pred_check_branch
      %723 = sbr.rel (0) target = $region37
    $region36: #{tpu_custom_call.1} parent=1 // pred_region
      %725 = dma.done [#allocation5], 128
    $region37: #{tpu_custom_call.1} parent=1 // pred_fallthru
      _
    %726 = vsyncpa [#allocation4], 1
    %727 = vsyncpa [#allocation7], 1
    %728 = vsyncpa [#allocation5], 1

</llo_original>
